<compile_context>
chip_gen: v5e
topology: v5e:2x2
jax: 0.10.0
libtpu: 0.0.40
codegen_flags: <defaults>
</compile_context>

<pallas_src>
import functools
import math

import jax
import jax.numpy as jnp
from jax import lax
from jax.experimental import pallas as pl
from jax.experimental.pallas import tpu as pltpu


def _embedding_bag_kernel(nvalid_ref, idx_ref, row_ref, scale_ref, w_ref,
                          out_ref, acc_ref, cnt_ref, *,
                          bags_per_block, vocab_tile, sqrt_d):
    """Grid = (bag_block, vocab_tile).  One (NB, D) output block per bag block."""
    b = pl.program_id(0)
    v = pl.program_id(1)
    nv = pl.num_programs(1)
    has_work = nvalid_ref[b] > 0          # any non-padding index in this block?

    @pl.when(jnp.logical_and(v == 0, has_work))
    def _init():
        acc_ref[...] = jnp.zeros_like(acc_ref)
        cnt_ref[...] = jnp.zeros_like(cnt_ref)

    @pl.when(has_work)
    def _accumulate():
        idx_col = idx_ref[...]            # (C, 1) int32, sentinel -1 for pad/tail
        rows = row_ref[...]               # (1, C) int32, sentinel -1 for tail
        c = idx_col.shape[0]

        # Vectorized one-hot build (lane-aligned compares); exact 0/1 -> bf16
        # is lossless and feeds the MXU at full rate.
        idx_local = idx_col - v * vocab_tile
        idx_onehot = (lax.broadcasted_iota(jnp.int32, (c, vocab_tile), 1)
                      == idx_local).astype(jnp.bfloat16)              # (C, TV)
        bag_onehot = (lax.broadcasted_iota(jnp.int32, (bags_per_block, c), 0)
                      == rows).astype(jnp.bfloat16)                   # (NB, C)

        # counts[r, t] = #(index == v*TV + t) in bag r  -- exact (f32 accum).
        counts = jnp.dot(bag_onehot, idx_onehot,
                         preferred_element_type=jnp.float32)          # (NB, TV)
        cnt_ref[...] += jnp.sum(counts, axis=-1, keepdims=True)

        # max_norm renorm folded into the counts columns; table stays in its
        # native dtype, DEFAULT MXU precision (no HIGHEST multi-pass emulation).
        counts_scaled = (counts * scale_ref[...]).astype(w_ref.dtype)
        acc_ref[...] += jnp.dot(counts_scaled, w_ref[...],
                                preferred_element_type=jnp.float32)   # (NB, D)

    @pl.when(jnp.logical_and(v == nv - 1, has_work))
    def _finalize():
        cnt = cnt_ref[...]
        denom = jnp.where(cnt > 0.0, cnt, 1.0)   # empty / all-padding bag -> 0
        out_ref[...] = (acc_ref[...] * (jnp.float32(sqrt_d) / denom)
                        ).astype(out_ref.dtype)

    @pl.when(jnp.logical_and(v == nv - 1, jnp.logical_not(has_work)))
    def _empty_block():
        out_ref[...] = jnp.zeros_like(out_ref)


def item_embeddings_forward(indices, offsets, weight, *, max_norm, padding_idx,
                            bags_per_block=128, vocab_tile=512):
    """Pallas equivalent of ItemEmbeddings.forward((indices, offsets))."""
    n = int(indices.shape[0])
    num_bags = int(offsets.shape[0])
    vocab, d_model = weight.shape

    if n == 0 or num_bags == 0:
        return jnp.zeros((num_bags, d_model), weight.dtype)

    indices = indices.astype(jnp.int32)
    offsets = offsets.astype(jnp.int32)

    # --- max_norm renorm as a (V,) scale vector (read table once, no scaled copy)
    w32 = weight.astype(jnp.float32)
    norm = jnp.sqrt(jnp.sum(w32 * w32, axis=-1))
    scale = jnp.where(norm > max_norm, max_norm / (norm + 1e-7), 1.0)

    # --- padding_idx -> out-of-range sentinel (-1): drops from sum AND count
    indices = jnp.where(indices == padding_idx, jnp.int32(-1), indices)

    # --- bag id per flat index position
    bag_ids = (jnp.searchsorted(offsets, jnp.arange(n, dtype=jnp.int32),
                                side="right").astype(jnp.int32) - 1)

    nb = int(bags_per_block)
    num_blocks = pl.cdiv(num_bags, nb)
    num_bags_p = num_blocks * nb

    # --- contiguous flat-index range per bag block
    offsets_ext = jnp.concatenate(
        [offsets, jnp.full((num_bags_p + 1 - num_bags,), n, jnp.int32)])
    blk_start = offsets_ext[0:num_bags_p:nb]               # (num_blocks,)
    blk_end = offsets_ext[nb::nb]                          # (num_blocks,)

    # Static, lane-aligned per-block capacity.
    try:
        max_per_block = int(jnp.max(blk_end - blk_start))
    except jax.errors.ConcretizationTypeError:             # traced wrapper: safe bound
        max_per_block = n
    cap = max(((max_per_block + 127) // 128) * 128, 128)

    # --- per-block, lane-aligned index / local-bag-row tiles (VMEM inputs)
    pos = blk_start[:, None] + jnp.arange(cap, dtype=jnp.int32)[None, :]
    in_range = pos < blk_end[:, None]
    pos_c = jnp.clip(pos, 0, n - 1)
    idx_blk = jnp.where(in_range, indices[pos_c], jnp.int32(-1))
    row_blk = jnp.where(
        in_range,
        bag_ids[pos_c] - jnp.arange(num_blocks, dtype=jnp.int32)[:, None] * nb,
        jnp.int32(-1))
    nvalid = jnp.sum((idx_blk >= 0).astype(jnp.int32), axis=1)   # per-block valid count

    idx_blk = idx_blk[:, :, None]        # (num_blocks, cap, 1)  -> kernel (cap, 1)
    row_blk = row_blk[:, None, :]        # (num_blocks, 1, cap)  -> kernel (1, cap)

    # --- vocab tiling (reduction grid axis) + zero padding of table / scale
    tv = min(int(vocab_tile), ((vocab + 127) // 128) * 128)
    tv = max((tv // 128) * 128, 128)
    num_vtiles = pl.cdiv(vocab, tv)
    vocab_p = num_vtiles * tv
    w_p, scale_p = weight, scale
    if vocab_p > vocab:
        w_p = jnp.concatenate(
            [weight, jnp.zeros((vocab_p - vocab, d_model), weight.dtype)], axis=0)
        scale_p = jnp.concatenate(
            [scale, jnp.zeros((vocab_p - vocab,), jnp.float32)])
    scale_p = scale_p.reshape(1, vocab_p)

    kernel = functools.partial(
        _embedding_bag_kernel,
        bags_per_block=nb, vocab_tile=tv, sqrt_d=math.sqrt(d_model))

    itemsize = jnp.dtype(weight.dtype).itemsize
    est = (2 * tv * d_model * itemsize          # weight tile (double-buffered)
           + 2 * tv * 4                         # scale tile
           + 4 * cap * 4                        # idx / row tiles
           + 2 * nb * d_model * itemsize        # output block
           + nb * d_model * 4 + nb * 4          # accumulator scratch
           + cap * tv * 2 + nb * cap * 2        # one-hot temporaries
           + nb * tv * 4 + nb * d_model * 4)    # counts / matmul temporaries
    vmem_limit = int(min(max(2 * est, 32 << 20), 64 << 20))

    out = pl.pallas_call(
        kernel,
        out_shape=jax.ShapeDtypeStruct((num_bags_p, d_model), weight.dtype),
        grid_spec=pltpu.PrefetchScalarGridSpec(
            num_scalar_prefetch=1,               # tiny per-block valid counts -> SMEM
            grid=(num_blocks, num_vtiles),
            in_specs=[
                pl.BlockSpec((None, cap, 1), lambda b, v, nv_ref: (b, 0, 0)),
                pl.BlockSpec((None, 1, cap), lambda b, v, nv_ref: (b, 0, 0)),
                pl.BlockSpec((1, tv), lambda b, v, nv_ref: (0, v)),
                pl.BlockSpec((tv, d_model), lambda b, v, nv_ref: (v, 0)),
            ],
            out_specs=pl.BlockSpec((nb, d_model), lambda b, v, nv_ref: (b, 0)),
            scratch_shapes=[pltpu.VMEM((nb, d_model), jnp.float32),
                            pltpu.VMEM((nb, 1), jnp.float32)],
        ),
        compiler_params=pltpu.CompilerParams(
            dimension_semantics=("parallel", "arbitrary"),
            vmem_limit_bytes=vmem_limit),
    )(nvalid, idx_blk, row_blk, scale_p, w_p)

    return out[:num_bags]


def reference_forward(indices, offsets, weight, *, max_norm, padding_idx):
    """Pure-JAX reference = torch.nn.EmbeddingBag(mode='mean', max_norm, padding_idx)."""
    n = int(indices.shape[0])
    num_bags = int(offsets.shape[0])
    d_model = weight.shape[1]
    w = weight.astype(jnp.float32)
    norm = jnp.sqrt(jnp.sum(w * w, axis=-1, keepdims=True))
    scl = jnp.where(norm > max_norm, max_norm / (norm + 1e-7), 1.0)
    rows = (w * scl)[indices]
    valid = (indices != padding_idx).astype(jnp.float32)[:, None]
    rows = rows * valid
    offs = [int(o) for o in offsets] + [n]
    outs = []
    for b in range(num_bags):
        s, e = offs[b], offs[b + 1]
        if e > s:
            seg = rows[s:e].sum(axis=0)
            c = float(valid[s:e].sum())
        else:
            seg, c = jnp.zeros((d_model,), jnp.float32), 0.0
        outs.append(seg / c if c > 0 else jnp.zeros((d_model,), jnp.float32))
    return jnp.stack(outs) * math.sqrt(d_model)


if __name__ == "__main__":
    def run_case(vocab_size, d_model, lengths, *, max_norm, padding_idx,
                 bags_per_block, vocab_tile, key):
        k_w, k_i = jax.random.split(key)
        weight = jax.random.normal(k_w, (vocab_size, d_model), dtype=jnp.float32)
        weight = weight.at[padding_idx].set(0.0)
        lengths = jnp.asarray(lengths, jnp.int32)
        offsets = jnp.concatenate([jnp.zeros((1,), jnp.int32),
                                   jnp.cumsum(lengths)[:-1].astype(jnp.int32)])
        n = int(lengths.sum())
        indices = jax.random.randint(k_i, (n,), 0, vocab_size, dtype=jnp.int32)
        indices = indices.at[1].set(padding_idx)       # padding entry inside a bag
        indices = indices.at[9].set(padding_idx)
        indices = indices.at[n - 2].set(padding_idx)

        out = item_embeddings_forward(
            indices, offsets, weight, max_norm=max_norm, padding_idx=padding_idx,
            bags_per_block=bags_per_block, vocab_tile=vocab_tile)
        out = jax.block_until_ready(out)
        ref = reference_forward(indices, offsets, weight,
                                max_norm=max_norm, padding_idx=padding_idx)
        assert out.shape == (offsets.shape[0], d_model)
        # counts @ W runs at DEFAULT MXU precision (per perf review), i.e. up to
        # bf16-level operand rounding vs the f32 reference -> relaxed tolerance.
        assert jnp.allclose(out, ref, atol=2e-2, rtol=2e-2), "mismatch vs reference"

    k1, k2 = jax.random.split(jax.random.PRNGKey(0))

    # Case 1: default MXU-sized bag block (128), single vocab tile, empty bags
    # and an all-padding bag.  11 bags, 25 flat indices, V=D=128.
    run_case(128, 128,
             [3, 2, 0, 4, 1, 5, 0, 3, 2, 4, 1],
             max_norm=1.0, padding_idx=0,
             bags_per_block=128, vocab_tile=512, key=k1)

    # Case 2: exercises multiple bag blocks, a vocab-tiled reduction axis (2 tiles)
    # and a completely empty bag block.  (bags_per_block=8 only to force multiple
    # blocks at this tiny size; the production default stays 128.)
    run_case(200, 64,
             [2, 0, 3, 1, 4, 2, 0, 5, 1, 3, 2, 4, 0, 2, 3, 1, 0, 0, 0, 0],
             max_norm=1.0, padding_idx=3,
             bags_per_block=8, vocab_tile=128, key=k2)

    print("KERNEL_OK")
</pallas_src>

<mosaic_0001>
module attributes {stable_mosaic.version = 11 : i64} {
  func.func @_embedding_bag_kernel(%arg0: i32, %arg1: i32, %arg2: memref<1xi32, #tpu.memory_space<smem>>, %arg3: memref<1x128x1xi32, #tpu.memory_space<vmem>>, %arg4: memref<1x1x128xi32, #tpu.memory_space<vmem>>, %arg5: memref<1x128xf32, #tpu.memory_space<vmem>>, %arg6: memref<128x128xf32, #tpu.memory_space<vmem>>, %arg7: memref<128x128xf32, #tpu.memory_space<vmem>>, %arg8: memref<128x128xf32, #tpu.memory_space<vmem>>, %arg9: memref<128x1xf32, #tpu.memory_space<vmem>>) attributes {dimension_semantics = [#tpu.dimension_semantics<parallel>, #tpu.dimension_semantics<arbitrary>], iteration_bounds = array<i64: 1, 1>, scalar_prefetch = 1 : i64, scratch_operands = 2 : i64, tpu.core_type = #tpu.core_type<tc>, window_params = [{transform_indices = @transform_0, window_bounds = array<i64: 1, 128, 1>}, {transform_indices = @transform_1, window_bounds = array<i64: 1, 1, 128>}, {transform_indices = @transform_2, window_bounds = array<i64: 1, 128>}, {transform_indices = @transform_3, window_bounds = array<i64: 128, 128>}, {transform_indices = @transform_4, window_bounds = array<i64: 128, 128>}]} {
    %0 = arith.index_cast %arg0 : i32 to index
    %1 = memref.load %arg2[%0] : memref<1xi32, #tpu.memory_space<smem>>
    %c0_i32 = arith.constant 0 : i32
    %2 = arith.cmpi sgt, %1, %c0_i32 : i32
    %c0_i32_0 = arith.constant 0 : i32
    %3 = arith.cmpi eq, %arg1, %c0_i32_0 : i32
    %4 = arith.andi %3, %2 : i1
    %5 = arith.extui %4 : i1 to i32
    %c0_i32_1 = arith.constant 0 : i32
    %6 = arith.cmpi ne, %5, %c0_i32_1 : i32
    scf.if %6 {
      %cst = arith.constant 0.000000e+00 : f32
      %18 = vector.broadcast %cst : f32 to vector<128x128xf32>
      %c0 = arith.constant 0 : index
      %c0_7 = arith.constant 0 : index
      %19 = vector.load %arg8[%c0, %c0_7] : memref<128x128xf32, #tpu.memory_space<vmem>>, vector<128x128xf32>
      tpu.vector_store %arg8[%c0, %c0_7], %18 {strides = array<i32>} : memref<128x128xf32, #tpu.memory_space<vmem>>, vector<128x128xf32>,
      %cst_8 = arith.constant 0.000000e+00 : f32
      %20 = vector.broadcast %cst_8 : f32 to vector<128x1xf32>
      %c0_9 = arith.constant 0 : index
      %c0_10 = arith.constant 0 : index
      %21 = vector.load %arg9[%c0_9, %c0_10] : memref<128x1xf32, #tpu.memory_space<vmem>>, vector<128x1xf32>
      tpu.vector_store %arg9[%c0_9, %c0_10], %20 {strides = array<i32>} : memref<128x1xf32, #tpu.memory_space<vmem>>, vector<128x1xf32>,
    } else {
    }
    %7 = arith.extui %2 : i1 to i32
    %c0_i32_2 = arith.constant 0 : i32
    %8 = arith.cmpi ne, %7, %c0_i32_2 : i32
    scf.if %8 {
      %c0 = arith.constant 0 : index
      %c0_7 = arith.constant 0 : index
      %c0_8 = arith.constant 0 : index
      %18 = vector.load %arg3[%c0, %c0_7, %c0_8] : memref<1x128x1xi32, #tpu.memory_space<vmem>>, vector<1x128x1xi32>
      %19 = vector.shape_cast %18 : vector<1x128x1xi32> to vector<128x1xi32>
      %c0_9 = arith.constant 0 : index
      %c0_10 = arith.constant 0 : index
      %c0_11 = arith.constant 0 : index
      %20 = vector.load %arg4[%c0_9, %c0_10, %c0_11] : memref<1x1x128xi32, #tpu.memory_space<vmem>>, vector<1x1x128xi32>
      %21 = vector.shape_cast %20 : vector<1x1x128xi32> to vector<1x128xi32>
      %c128_i32 = arith.constant 128 : i32
      %22 = arith.muli %arg1, %c128_i32 : i32
      %23 = vector.broadcast %22 : i32 to vector<128x1xi32>
      %24 = arith.subi %19, %23 : vector<128x1xi32>
      %25 = tpu.iota {dimensions = array<i32: 1>} : vector<128x128xi32>
      %26 = vector.broadcast %24 : vector<128x1xi32> to vector<128x128xi32>
      %27 = arith.cmpi eq, %25, %26 : vector<128x128xi32>
      %28 = arith.extui %27 : vector<128x128xi1> to vector<128x128xi32>
      %29 = arith.sitofp %28 : vector<128x128xi32> to vector<128x128xf32>
      %30 = arith.truncf %29 : vector<128x128xf32> to vector<128x128xbf16>
      %31 = tpu.iota {dimensions = array<i32: 0>} : vector<128x128xi32>
      %32 = vector.broadcast %21 : vector<1x128xi32> to vector<128x128xi32>
      %33 = arith.cmpi eq, %31, %32 : vector<128x128xi32>
      %34 = arith.extui %33 : vector<128x128xi1> to vector<128x128xi32>
      %35 = arith.sitofp %34 : vector<128x128xi32> to vector<128x128xf32>
      %36 = arith.truncf %35 : vector<128x128xf32> to vector<128x128xbf16>
      %cst = arith.constant dense<0.000000e+00> : vector<128x128xf32>
      %37 = tpu.matmul %36, %30, %cst {dimension_numbers = #tpu.dot_dimension_numbers<[1], [0], [0], [1], [0, 0, 1, 1], [], []>} : vector<128x128xbf16>, vector<128x128xbf16>, vector<128x128xf32> -> vector<128x128xf32>
      %c0_12 = arith.constant 0 : index
      %c0_13 = arith.constant 0 : index
      %38 = vector.load %arg9[%c0_12, %c0_13] : memref<128x1xf32, #tpu.memory_space<vmem>>, vector<128x1xf32>
      %cst_14 = arith.constant dense<0.000000e+00> : vector<128xf32>
      %39 = vector.multi_reduction <add>, %37, %cst_14 [1] : vector<128x128xf32> to vector<128xf32>
      %40 = vector.shape_cast %39 : vector<128xf32> to vector<128x1xf32>
      %41 = arith.addf %38, %40 : vector<128x1xf32>
      %c0_15 = arith.constant 0 : index
      %c0_16 = arith.constant 0 : index
      %42 = vector.load %arg9[%c0_15, %c0_16] : memref<128x1xf32, #tpu.memory_space<vmem>>, vector<128x1xf32>
      tpu.vector_store %arg9[%c0_15, %c0_16], %41 {strides = array<i32>} : memref<128x1xf32, #tpu.memory_space<vmem>>, vector<128x1xf32>,
      %c0_17 = arith.constant 0 : index
      %c0_18 = arith.constant 0 : index
      %43 = vector.load %arg5[%c0_17, %c0_18] : memref<1x128xf32, #tpu.memory_space<vmem>>, vector<1x128xf32>
      %44 = vector.broadcast %43 : vector<1x128xf32> to vector<128x128xf32>
      %45 = arith.mulf %37, %44 : vector<128x128xf32>
      %c0_19 = arith.constant 0 : index
      %c0_20 = arith.constant 0 : index
      %46 = vector.load %arg8[%c0_19, %c0_20] : memref<128x128xf32, #tpu.memory_space<vmem>>, vector<128x128xf32>
      %c0_21 = arith.constant 0 : index
      %c0_22 = arith.constant 0 : index
      %47 = vector.load %arg6[%c0_21, %c0_22] : memref<128x128xf32, #tpu.memory_space<vmem>>, vector<128x128xf32>
      %cst_23 = arith.constant dense<0.000000e+00> : vector<128x128xf32>
      %48 = tpu.matmul %45, %47, %cst_23 {dimension_numbers = #tpu.dot_dimension_numbers<[1], [0], [0], [1], [0, 0, 1, 1], [], []>} : vector<128x128xf32>, vector<128x128xf32>, vector<128x128xf32> -> vector<128x128xf32>
      %49 = arith.addf %46, %48 : vector<128x128xf32>
      %c0_24 = arith.constant 0 : index
      %c0_25 = arith.constant 0 : index
      %50 = vector.load %arg8[%c0_24, %c0_25] : memref<128x128xf32, #tpu.memory_space<vmem>>, vector<128x128xf32>
      tpu.vector_store %arg8[%c0_24, %c0_25], %49 {strides = array<i32>} : memref<128x128xf32, #tpu.memory_space<vmem>>, vector<128x128xf32>,
    } else {
    }
    %c0_i32_3 = arith.constant 0 : i32
    %9 = arith.cmpi eq, %arg1, %c0_i32_3 : i32
    %10 = arith.andi %9, %2 : i1
    %11 = arith.extui %10 : i1 to i32
    %c0_i32_4 = arith.constant 0 : i32
    %12 = arith.cmpi ne, %11, %c0_i32_4 : i32
    scf.if %12 {
      %c0 = arith.constant 0 : index
      %c0_7 = arith.constant 0 : index
      %18 = vector.load %arg9[%c0, %c0_7] : memref<128x1xf32, #tpu.memory_space<vmem>>, vector<128x1xf32>
      %cst = arith.constant 0.000000e+00 : f32
      %19 = vector.broadcast %cst : f32 to vector<128x1xf32>
      %20 = arith.cmpf ogt, %18, %19 : vector<128x1xf32>
      %cst_8 = arith.constant 1.000000e+00 : f32
      %21 = vector.broadcast %cst_8 : f32 to vector<128x1xf32>
      %22 = arith.select %20, %18, %21 : vector<128x1xi1>, vector<128x1xf32>
      %c0_9 = arith.constant 0 : index
      %c0_10 = arith.constant 0 : index
      %23 = vector.load %arg8[%c0_9, %c0_10] : memref<128x128xf32, #tpu.memory_space<vmem>>, vector<128x128xf32>
      %cst_11 = arith.constant 11.3137083 : f32
      %24 = vector.broadcast %cst_11 : f32 to vector<128x1xf32>
      %25 = arith.divf %24, %22 : vector<128x1xf32>
      %26 = vector.broadcast %25 : vector<128x1xf32> to vector<128x128xf32>
      %27 = arith.mulf %23, %26 : vector<128x128xf32>
      %c0_12 = arith.constant 0 : index
      %c0_13 = arith.constant 0 : index
      %28 = vector.load %arg7[%c0_12, %c0_13] : memref<128x128xf32, #tpu.memory_space<vmem>>, vector<128x128xf32>
      tpu.vector_store %arg7[%c0_12, %c0_13], %27 {strides = array<i32>} : memref<128x128xf32, #tpu.memory_space<vmem>>, vector<128x128xf32>,
    } else {
    }
    %c0_i32_5 = arith.constant 0 : i32
    %13 = arith.cmpi eq, %arg1, %c0_i32_5 : i32
    %true = arith.constant true
    %14 = arith.xori %2, %true : i1
    %15 = arith.andi %13, %14 : i1
    %16 = arith.extui %15 : i1 to i32
    %c0_i32_6 = arith.constant 0 : i32
    %17 = arith.cmpi ne, %16, %c0_i32_6 : i32
    scf.if %17 {
      %cst = arith.constant 0.000000e+00 : f32
      %18 = vector.broadcast %cst : f32 to vector<128x128xf32>
      %c0 = arith.constant 0 : index
      %c0_7 = arith.constant 0 : index
      %19 = vector.load %arg7[%c0, %c0_7] : memref<128x128xf32, #tpu.memory_space<vmem>>, vector<128x128xf32>
      tpu.vector_store %arg7[%c0, %c0_7], %18 {strides = array<i32>} : memref<128x128xf32, #tpu.memory_space<vmem>>, vector<128x128xf32>,
    } else {
    }
    return
  }
  func.func @transform_0(%arg0: i32, %arg1: i32, %arg2: memref<1xi32, #tpu.memory_space<smem>>) -> (i32, i32, i32) {
    %c0_i32 = arith.constant 0 : i32
    %c0_i32_0 = arith.constant 0 : i32
    %c0_i32_1 = arith.constant 0 : i32
    return %arg0, %c0_i32, %c0_i32_0 : i32, i32, i32
  }
  func.func @transform_1(%arg0: i32, %arg1: i32, %arg2: memref<1xi32, #tpu.memory_space<smem>>) -> (i32, i32, i32) {
    %c0_i32 = arith.constant 0 : i32
    %c0_i32_0 = arith.constant 0 : i32
    %c0_i32_1 = arith.constant 0 : i32
    return %arg0, %c0_i32, %c0_i32_0 : i32, i32, i32
  }
  func.func @transform_2(%arg0: i32, %arg1: i32, %arg2: memref<1xi32, #tpu.memory_space<smem>>) -> (i32, i32) {
    %c0_i32 = arith.constant 0 : i32
    %c0_i32_0 = arith.constant 0 : i32
    return %c0_i32, %arg1 : i32, i32
  }
  func.func @transform_3(%arg0: i32, %arg1: i32, %arg2: memref<1xi32, #tpu.memory_space<smem>>) -> (i32, i32) {
    %c0_i32 = arith.constant 0 : i32
    %c0_i32_0 = arith.constant 0 : i32
    return %arg1, %c0_i32 : i32, i32
  }
  func.func @transform_4(%arg0: i32, %arg1: i32, %arg2: memref<1xi32, #tpu.memory_space<smem>>) -> (i32, i32) {
    %c0_i32 = arith.constant 0 : i32
    %c0_i32_0 = arith.constant 0 : i32
    return %arg0, %c0_i32 : i32, i32
  }
}

</mosaic_0001>

<llo_original>
// kernel: tpu_custom_call.1
$region0: #{tpu_custom_call.1}
  #allocation0 [shape = 'u32[]', space=smem, size = 0x4, offset = 0x4, fixed_abs, tag = 'smem constant byte address 0x4 - core index']
  #allocation1 [shape = 'u32[72,128]{1,0:T(1,128)}', space=vmem, size = 0x9000, scoped, tag = 'internal scratch']
  #allocation2 [shape = 'f32[128,128]{1,0:T(8,128)}', space=vmem, size = 0x10000, scoped, tag = 'scratch operand']
  #allocation3 [shape = 'f32[128,1]{1,0:T(8,128)}', space=vmem, size = 0x10000, scoped, tag = 'scratch operand']
  #allocation4 [shape = 's32[1]{0}', space=sflag, size = 0x4, scoped, tag = 'scoped memory for tpu_custom_call.1']
  #allocation5 [shape = 's32[1]{0:T(128)S(6)}', space=smem, size = 0x200, scoped, tag = 'prefetched SMEM operand 0']
  %s0 = inlined_call_operand.<no memory space> [shape: s32[1], index: 0, kind: input, shape index: {}]
  %s1 = inlined_call_operand.vmem [shape: s32[1,128,1], index: 1, kind: input, shape index: {}]
  %s2 = inlined_call_operand.vmem [shape: s32[1,1,128], index: 2, kind: input, shape index: {}]
  %s3 = inlined_call_operand.vmem [shape: f32[1,128], index: 3, kind: input, shape index: {}]
  %s4 = inlined_call_operand.vmem [shape: f32[128,128], index: 4, kind: input, shape index: {}]
  %s5 = inlined_call_operand.hbm [shape: f32[128,128], index: 5, kind: output, shape index: {}]
  %s6 = sld [smem:[#allocation0]]
  $region42: #{tpu_custom_call.1} parent=0
    _
  %s8 = ssub.s32 1, %s6
  %s9 = scalar_select 0, %s8, %s6
  %10 = sst [smem:[#allocation5]] %s0
  $region1: #{tpu_custom_call.1} parent=0
    #allocation6 [shape = 'u8[65536]{0}', space=vmem, size = 0x10000, scoped, tag = 'output window, operand 0, single buffered']
    #allocation7 [shape = 's32[1]{0}', space=sflag, size = 0x4, scoped, tag = 'scoped memory for tpu_custom_call.1']
    %11 = vsyncpa [#allocation7], 0
    // Predicated region
    $region2: #{tpu_custom_call.1} parent=1 // pred_check
      _
    $region3: #{tpu_custom_call.1} parent=1 // pred_check_branch
      %13 = sbr.rel (0) target = $region5
    $region4: #{tpu_custom_call.1} parent=1 // pred_region
      _
    $region5: #{tpu_custom_call.1} parent=1 // pred_fallthru
      _
    // Predicated region
    $region6: #{tpu_custom_call.1} parent=1 // pred_check
      _
    $region7: #{tpu_custom_call.1} parent=1 // pred_check_branch
      %15 = sbr.rel (0) target = $region9
    $region8: #{tpu_custom_call.1} parent=1 // pred_region
      _
    $region9: #{tpu_custom_call.1} parent=1 // pred_fallthru
      _
    // Predicated region
    $region10: #{tpu_custom_call.1} parent=1 // pred_check
      _
    $region11: #{tpu_custom_call.1} parent=1 // pred_check_branch
      %17 = sbr.rel (0) target = $region13
    $region12: #{tpu_custom_call.1} parent=1 // pred_region
      _
    $region13: #{tpu_custom_call.1} parent=1 // pred_fallthru
      _
    // Predicated region
    $region14: #{tpu_custom_call.1} parent=1 // pred_check
      _
    $region15: #{tpu_custom_call.1} parent=1 // pred_check_branch
      %19 = sbr.rel (0) target = $region17
    $region16: #{tpu_custom_call.1} parent=1 // pred_region
      _
    $region17: #{tpu_custom_call.1} parent=1 // pred_fallthru
      _
    %s20 = sld [smem:[#allocation5]]
    %p21 = scmp.gt.s32.totalorder %s20, 0
    %p22 = scmp.eq.s32.totalorder 0, 0
    %p23 = pnand %p22, %p21
    %p24 = pneg %p23
    // Predicated region
    $region18: #{tpu_custom_call.1} parent=1 // pred_check
      _
    $region19: #{tpu_custom_call.1} parent=1 // pred_check_branch
      %26 = sbr.rel (%p23) target = $region21
    $region20: #{tpu_custom_call.1} parent=1 // pred_region
      %27 = vst [vmem:[#allocation2] sm:$0xff] 0.0
      %28 = vst [vmem:[#allocation2 + $0x8] sm:$0xff] 0.0
      %29 = vst [vmem:[#allocation2 + $0x10] sm:$0xff] 0.0
      %30 = vst [vmem:[#allocation2 + $0x18] sm:$0xff] 0.0
      %31 = vst [vmem:[#allocation2 + $0x20] sm:$0xff] 0.0
      %32 = vst [vmem:[#allocation2 + $0x28] sm:$0xff] 0.0
      %33 = vst [vmem:[#allocation2 + $0x30] sm:$0xff] 0.0
      %34 = vst [vmem:[#allocation2 + $0x38] sm:$0xff] 0.0
      %35 = vst [vmem:[#allocation2 + $0x40] sm:$0xff] 0.0
      %36 = vst [vmem:[#allocation2 + $0x48] sm:$0xff] 0.0
      %37 = vst [vmem:[#allocation2 + $0x50] sm:$0xff] 0.0
      %38 = vst [vmem:[#allocation2 + $0x58] sm:$0xff] 0.0
      %39 = vst [vmem:[#allocation2 + $0x60] sm:$0xff] 0.0
      %40 = vst [vmem:[#allocation2 + $0x68] sm:$0xff] 0.0
      %41 = vst [vmem:[#allocation2 + $0x70] sm:$0xff] 0.0
      %42 = vst [vmem:[#allocation2 + $0x78] sm:$0xff] 0.0
      %vm43 = vcmask 7168
      %44 = vst.msk [vmem:[#allocation3] sm:$0xff] %vm43, 0.0
      %45 = vst.msk [vmem:[#allocation3 + $0x8] sm:$0xff] %vm43, 0.0
      %46 = vst.msk [vmem:[#allocation3 + $0x10] sm:$0xff] %vm43, 0.0
      %47 = vst.msk [vmem:[#allocation3 + $0x18] sm:$0xff] %vm43, 0.0
      %48 = vst.msk [vmem:[#allocation3 + $0x20] sm:$0xff] %vm43, 0.0
      %49 = vst.msk [vmem:[#allocation3 + $0x28] sm:$0xff] %vm43, 0.0
      %50 = vst.msk [vmem:[#allocation3 + $0x30] sm:$0xff] %vm43, 0.0
      %51 = vst.msk [vmem:[#allocation3 + $0x38] sm:$0xff] %vm43, 0.0
      %52 = vst.msk [vmem:[#allocation3 + $0x40] sm:$0xff] %vm43, 0.0
      %53 = vst.msk [vmem:[#allocation3 + $0x48] sm:$0xff] %vm43, 0.0
      %54 = vst.msk [vmem:[#allocation3 + $0x50] sm:$0xff] %vm43, 0.0
      %55 = vst.msk [vmem:[#allocation3 + $0x58] sm:$0xff] %vm43, 0.0
      %56 = vst.msk [vmem:[#allocation3 + $0x60] sm:$0xff] %vm43, 0.0
      %57 = vst.msk [vmem:[#allocation3 + $0x68] sm:$0xff] %vm43, 0.0
      %58 = vst.msk [vmem:[#allocation3 + $0x70] sm:$0xff] %vm43, 0.0
      %59 = vst.msk [vmem:[#allocation3 + $0x78] sm:$0xff] %vm43, 0.0
    $region21: #{tpu_custom_call.1} parent=1 // pred_fallthru
      _
    // Predicated region
    $region22: #{tpu_custom_call.1} parent=1 // pred_check
      %p60 = pneg %p21
    $region23: #{tpu_custom_call.1} parent=1 // pred_check_branch
      %62 = sbr.rel (%p60) target = $region25
    $region24: #{tpu_custom_call.1} parent=1 // pred_region
      %v63 = vld [vmem:[%s1] sm:$0xff]
      %v64 = vld [vmem:[%s1 + $0x8] sm:$0xff]
      %v65 = vld [vmem:[%s1 + $0x10] sm:$0xff]
      %v66 = vld [vmem:[%s1 + $0x18] sm:$0xff]
      %v67 = vld [vmem:[%s1 + $0x20] sm:$0xff]
      %v68 = vld [vmem:[%s1 + $0x28] sm:$0xff]
      %v69 = vld [vmem:[%s1 + $0x30] sm:$0xff]
      %v70 = vld [vmem:[%s1 + $0x38] sm:$0xff]
      %v71 = vld [vmem:[%s1 + $0x40] sm:$0xff]
      %v72 = vld [vmem:[%s1 + $0x48] sm:$0xff]
      %v73 = vld [vmem:[%s1 + $0x50] sm:$0xff]
      %v74 = vld [vmem:[%s1 + $0x58] sm:$0xff]
      %v75 = vld [vmem:[%s1 + $0x60] sm:$0xff]
      %v76 = vld [vmem:[%s1 + $0x68] sm:$0xff]
      %v77 = vld [vmem:[%s1 + $0x70] sm:$0xff]
      %v78 = vld [vmem:[%s1 + $0x78] sm:$0xff]
      %v79 = vld [vmem:[%s2] sm:$0x1]
      %s80 = smul.u32 0, 128
      %v81 = vstv %s80
      %v82 = vsub.s32 %v63, %v81
      %v83 = vsub.s32 %v64, %v81
      %v84 = vsub.s32 %v65, %v81
      %v85 = vsub.s32 %v66, %v81
      %v86 = vsub.s32 %v67, %v81
      %v87 = vsub.s32 %v68, %v81
      %v88 = vsub.s32 %v69, %v81
      %v89 = vsub.s32 %v70, %v81
      %v90 = vsub.s32 %v71, %v81
      %v91 = vsub.s32 %v72, %v81
      %v92 = vsub.s32 %v73, %v81
      %v93 = vsub.s32 %v74, %v81
      %v94 = vsub.s32 %v75, %v81
      %v95 = vsub.s32 %v76, %v81
      %v96 = vsub.s32 %v77, %v81
      %v97 = vsub.s32 %v78, %v81
      %v98 = vlaneseq
      %v99 = vand.u32 %v98, 127
      %100 = vset.pattern.permute.xlu0 0
      %101 = vperm.xlu0 %100, %v82
      %v102 = vpop.permute.xlu0 %101
      %103 = vset.pattern.permute.xlu0 0
      %104 = vperm.xlu0 %103, %v83
      %v105 = vpop.permute.xlu0 %104
      %106 = vset.pattern.permute.xlu0 0
      %107 = vperm.xlu0 %106, %v84
      %v108 = vpop.permute.xlu0 %107
      %109 = vset.pattern.permute.xlu0 0
      %110 = vperm.xlu0 %109, %v85
      %v111 = vpop.permute.xlu0 %110
      %112 = vset.pattern.permute.xlu0 0
      %113 = vperm.xlu0 %112, %v86
      %v114 = vpop.permute.xlu0 %113
      %115 = vset.pattern.permute.xlu0 0
      %116 = vperm.xlu0 %115, %v87
      %v117 = vpop.permute.xlu0 %116
      %118 = vset.pattern.permute.xlu0 0
      %119 = vperm.xlu0 %118, %v88
      %v120 = vpop.permute.xlu0 %119
      %121 = vset.pattern.permute.xlu0 0
      %122 = vperm.xlu0 %121, %v89
      %v123 = vpop.permute.xlu0 %122
      %124 = vset.pattern.permute.xlu0 0
      %125 = vperm.xlu0 %124, %v90
      %v126 = vpop.permute.xlu0 %125
      %127 = vset.pattern.permute.xlu0 0
      %128 = vperm.xlu0 %127, %v91
      %v129 = vpop.permute.xlu0 %128
      %130 = vset.pattern.permute.xlu0 0
      %131 = vperm.xlu0 %130, %v92
      %v132 = vpop.permute.xlu0 %131
      %133 = vset.pattern.permute.xlu0 0
      %134 = vperm.xlu0 %133, %v93
      %v135 = vpop.permute.xlu0 %134
      %136 = vset.pattern.permute.xlu0 0
      %137 = vperm.xlu0 %136, %v94
      %v138 = vpop.permute.xlu0 %137
      %139 = vset.pattern.permute.xlu0 0
      %140 = vperm.xlu0 %139, %v95
      %v141 = vpop.permute.xlu0 %140
      %142 = vset.pattern.permute.xlu0 0
      %143 = vperm.xlu0 %142, %v96
      %v144 = vpop.permute.xlu0 %143
      %145 = vset.pattern.permute.xlu0 0
      %146 = vperm.xlu0 %145, %v97
      %v147 = vpop.permute.xlu0 %146
      %vm148 = vcmp.eq.s32.totalorder %v99, %v102
      %vm149 = vcmp.eq.s32.totalorder %v99, %v105
      %vm150 = vcmp.eq.s32.totalorder %v99, %v108
      %vm151 = vcmp.eq.s32.totalorder %v99, %v111
      %vm152 = vcmp.eq.s32.totalorder %v99, %v114
      %vm153 = vcmp.eq.s32.totalorder %v99, %v117
      %vm154 = vcmp.eq.s32.totalorder %v99, %v120
      %vm155 = vcmp.eq.s32.totalorder %v99, %v123
      %vm156 = vcmp.eq.s32.totalorder %v99, %v126
      %vm157 = vcmp.eq.s32.totalorder %v99, %v129
      %vm158 = vcmp.eq.s32.totalorder %v99, %v132
      %vm159 = vcmp.eq.s32.totalorder %v99, %v135
      %vm160 = vcmp.eq.s32.totalorder %v99, %v138
      %vm161 = vcmp.eq.s32.totalorder %v99, %v141
      %vm162 = vcmp.eq.s32.totalorder %v99, %v144
      %vm163 = vcmp.eq.s32.totalorder %v99, %v147
      %v164 = vsel %vm148, 1, 0
      %v165 = vsel %vm149, 1, 0
      %v166 = vsel %vm150, 1, 0
      %v167 = vsel %vm151, 1, 0
      %v168 = vsel %vm152, 1, 0
      %v169 = vsel %vm153, 1, 0
      %v170 = vsel %vm154, 1, 0
      %v171 = vsel %vm155, 1, 0
      %v172 = vsel %vm156, 1, 0
      %v173 = vsel %vm157, 1, 0
      %v174 = vsel %vm158, 1, 0
      %v175 = vsel %vm159, 1, 0
      %v176 = vsel %vm160, 1, 0
      %v177 = vsel %vm161, 1, 0
      %v178 = vsel %vm162, 1, 0
      %v179 = vsel %vm163, 1, 0
      %v180 = vcvt.s32.f32 %v164
      %v181 = vcvt.s32.f32 %v165
      %v182 = vcvt.s32.f32 %v166
      %v183 = vcvt.s32.f32 %v167
      %v184 = vcvt.s32.f32 %v168
      %v185 = vcvt.s32.f32 %v169
      %v186 = vcvt.s32.f32 %v170
      %v187 = vcvt.s32.f32 %v171
      %v188 = vcvt.s32.f32 %v172
      %v189 = vcvt.s32.f32 %v173
      %v190 = vcvt.s32.f32 %v174
      %v191 = vcvt.s32.f32 %v175
      %v192 = vcvt.s32.f32 %v176
      %v193 = vcvt.s32.f32 %v177
      %v194 = vcvt.s32.f32 %v178
      %v195 = vcvt.s32.f32 %v179
      %v196 = vpack.c.bf16 %v181, %v180
      %v197 = vpack.c.bf16 %v183, %v182
      %v198 = vpack.c.bf16 %v185, %v184
      %v199 = vpack.c.bf16 %v187, %v186
      %v200 = vpack.c.bf16 %v189, %v188
      %v201 = vpack.c.bf16 %v191, %v190
      %v202 = vpack.c.bf16 %v193, %v192
      %v203 = vpack.c.bf16 %v195, %v194
      %v204 = vlaneseq
      %v205 = vshrl.u32 %v204, 7
      %v206 = vadd.s32 %v205, 8
      %v207 = vadd.s32 %v205, 16
      %v208 = vadd.s32 %v205, 24
      %v209 = vadd.s32 %v205, 32
      %v210 = vadd.s32 %v205, 40
      %v211 = vadd.s32 %v205, 48
      %v212 = vadd.s32 %v205, 56
      %v213 = vadd.s32 %v205, 64
      %v214 = vadd.s32 %v205, 72
      %v215 = vadd.s32 %v205, 80
      %v216 = vadd.s32 %v205, 88
      %v217 = vadd.s32 %v205, 96
      %v218 = vadd.s32 %v205, 104
      %v219 = vadd.s32 %v205, 112
      %v220 = vadd.s32 %v205, 120
      %v221 = vperm.slane %v79, 0
      %vm222 = vcmp.eq.s32.totalorder %v205, %v221
      %vm223 = vcmp.eq.s32.totalorder %v206, %v221
      %vm224 = vcmp.eq.s32.totalorder %v207, %v221
      %vm225 = vcmp.eq.s32.totalorder %v208, %v221
      %vm226 = vcmp.eq.s32.totalorder %v209, %v221
      %vm227 = vcmp.eq.s32.totalorder %v210, %v221
      %vm228 = vcmp.eq.s32.totalorder %v211, %v221
      %vm229 = vcmp.eq.s32.totalorder %v212, %v221
      %vm230 = vcmp.eq.s32.totalorder %v213, %v221
      %vm231 = vcmp.eq.s32.totalorder %v214, %v221
      %vm232 = vcmp.eq.s32.totalorder %v215, %v221
      %vm233 = vcmp.eq.s32.totalorder %v216, %v221
      %vm234 = vcmp.eq.s32.totalorder %v217, %v221
      %vm235 = vcmp.eq.s32.totalorder %v218, %v221
      %vm236 = vcmp.eq.s32.totalorder %v219, %v221
      %vm237 = vcmp.eq.s32.totalorder %v220, %v221
      %v238 = vsel %vm222, 1, 0
      %v239 = vsel %vm223, 1, 0
      %v240 = vsel %vm224, 1, 0
      %v241 = vsel %vm225, 1, 0
      %v242 = vsel %vm226, 1, 0
      %v243 = vsel %vm227, 1, 0
      %v244 = vsel %vm228, 1, 0
      %v245 = vsel %vm229, 1, 0
      %v246 = vsel %vm230, 1, 0
      %v247 = vsel %vm231, 1, 0
      %v248 = vsel %vm232, 1, 0
      %v249 = vsel %vm233, 1, 0
      %v250 = vsel %vm234, 1, 0
      %v251 = vsel %vm235, 1, 0
      %v252 = vsel %vm236, 1, 0
      %v253 = vsel %vm237, 1, 0
      %v254 = vcvt.s32.f32 %v238
      %v255 = vcvt.s32.f32 %v239
      %v256 = vcvt.s32.f32 %v240
      %v257 = vcvt.s32.f32 %v241
      %v258 = vcvt.s32.f32 %v242
      %v259 = vcvt.s32.f32 %v243
      %v260 = vcvt.s32.f32 %v244
      %v261 = vcvt.s32.f32 %v245
      %v262 = vcvt.s32.f32 %v246
      %v263 = vcvt.s32.f32 %v247
      %v264 = vcvt.s32.f32 %v248
      %v265 = vcvt.s32.f32 %v249
      %v266 = vcvt.s32.f32 %v250
      %v267 = vcvt.s32.f32 %v251
      %v268 = vcvt.s32.f32 %v252
      %v269 = vcvt.s32.f32 %v253
      %v270 = vpack.c.bf16 %v255, %v254
      %v271 = vpack.c.bf16 %v257, %v256
      %v272 = vpack.c.bf16 %v259, %v258
      %v273 = vpack.c.bf16 %v261, %v260
      %v274 = vpack.c.bf16 %v263, %v262
      %v275 = vpack.c.bf16 %v265, %v264
      %v276 = vpack.c.bf16 %v267, %v266
      %v277 = vpack.c.bf16 %v269, %v268
      %278 = vmatpush.bf16.msra.mxu0 %v203
      %279 = vmatpush.bf16.msra.mxu0 %v202
      %280 = vmatpush.bf16.msra.mxu0 %v201
      %281 = vmatpush.bf16.msra.mxu0 %v200
      %282 = vmatpush.bf16.msra.mxu0 %v199
      %283 = vmatpush.bf16.msra.mxu0 %v198
      %284 = vmatpush.bf16.msra.mxu0 %v197
      %285 = vmatpush.bf16.msra.mxu0 %v196
      %286 = vmatmul.bf16.gmra.mxu0 %v270
      %v287 = vpop.f32.mrf.mxu0
      %v288 = vadd.f32 0.0, %v287
      %v289 = vpop.f32.mrf.mxu0
      %v290 = vadd.f32 0.0, %v289
      %291 = vmatmul.bf16.gmra.mxu0 %v271
      %v292 = vpop.f32.mrf.mxu0
      %v293 = vadd.f32 0.0, %v292
      %v294 = vpop.f32.mrf.mxu0
      %v295 = vadd.f32 0.0, %v294
      %296 = vmatmul.bf16.gmra.mxu0 %v272
      %v297 = vpop.f32.mrf.mxu0
      %v298 = vadd.f32 0.0, %v297
      %v299 = vpop.f32.mrf.mxu0
      %v300 = vadd.f32 0.0, %v299
      %301 = vmatmul.bf16.gmra.mxu0 %v273
      %v302 = vpop.f32.mrf.mxu0
      %v303 = vadd.f32 0.0, %v302
      %v304 = vpop.f32.mrf.mxu0
      %v305 = vadd.f32 0.0, %v304
      %306 = vmatmul.bf16.gmra.mxu0 %v274
      %v307 = vpop.f32.mrf.mxu0
      %v308 = vadd.f32 0.0, %v307
      %v309 = vpop.f32.mrf.mxu0
      %v310 = vadd.f32 0.0, %v309
      %311 = vmatmul.bf16.gmra.mxu0 %v275
      %v312 = vpop.f32.mrf.mxu0
      %v313 = vadd.f32 0.0, %v312
      %v314 = vpop.f32.mrf.mxu0
      %v315 = vadd.f32 0.0, %v314
      %316 = vmatmul.bf16.gmra.mxu0 %v276
      %v317 = vpop.f32.mrf.mxu0
      %v318 = vadd.f32 0.0, %v317
      %v319 = vpop.f32.mrf.mxu0
      %v320 = vadd.f32 0.0, %v319
      %321 = vmatmul.bf16.gmra.mxu0 %v277
      %v322 = vpop.f32.mrf.mxu0
      %v323 = vadd.f32 0.0, %v322
      %v324 = vpop.f32.mrf.mxu0
      %v325 = vadd.f32 0.0, %v324
      %326 = vdwg.mxu0
      %v327 = vld [vmem:[#allocation3] sm:$0xff]
      %v328 = vld [vmem:[#allocation3 + $0x8] sm:$0xff]
      %v329 = vld [vmem:[#allocation3 + $0x10] sm:$0xff]
      %v330 = vld [vmem:[#allocation3 + $0x18] sm:$0xff]
      %v331 = vld [vmem:[#allocation3 + $0x20] sm:$0xff]
      %v332 = vld [vmem:[#allocation3 + $0x28] sm:$0xff]
      %v333 = vld [vmem:[#allocation3 + $0x30] sm:$0xff]
      %v334 = vld [vmem:[#allocation3 + $0x38] sm:$0xff]
      %v335 = vld [vmem:[#allocation3 + $0x40] sm:$0xff]
      %v336 = vld [vmem:[#allocation3 + $0x48] sm:$0xff]
      %v337 = vld [vmem:[#allocation3 + $0x50] sm:$0xff]
      %v338 = vld [vmem:[#allocation3 + $0x58] sm:$0xff]
      %v339 = vld [vmem:[#allocation3 + $0x60] sm:$0xff]
      %v340 = vld [vmem:[#allocation3 + $0x68] sm:$0xff]
      %v341 = vld [vmem:[#allocation3 + $0x70] sm:$0xff]
      %v342 = vld [vmem:[#allocation3 + $0x78] sm:$0xff]
      %343 = vadd.xlane.f32.xlu0 %v288
      %v344 = vpop.xlane.xlu0 %343
      %345 = vadd.xlane.f32.xlu0 %v290
      %v346 = vpop.xlane.xlu0 %345
      %347 = vadd.xlane.f32.xlu0 %v293
      %v348 = vpop.xlane.xlu0 %347
      %349 = vadd.xlane.f32.xlu0 %v295
      %v350 = vpop.xlane.xlu0 %349
      %351 = vadd.xlane.f32.xlu0 %v298
      %v352 = vpop.xlane.xlu0 %351
      %353 = vadd.xlane.f32.xlu0 %v300
      %v354 = vpop.xlane.xlu0 %353
      %355 = vadd.xlane.f32.xlu0 %v303
      %v356 = vpop.xlane.xlu0 %355
      %357 = vadd.xlane.f32.xlu0 %v305
      %v358 = vpop.xlane.xlu0 %357
      %359 = vadd.xlane.f32.xlu0 %v308
      %v360 = vpop.xlane.xlu0 %359
      %361 = vadd.xlane.f32.xlu0 %v310
      %v362 = vpop.xlane.xlu0 %361
      %363 = vadd.xlane.f32.xlu0 %v313
      %v364 = vpop.xlane.xlu0 %363
      %365 = vadd.xlane.f32.xlu0 %v315
      %v366 = vpop.xlane.xlu0 %365
      %367 = vadd.xlane.f32.xlu0 %v318
      %v368 = vpop.xlane.xlu0 %367
      %369 = vadd.xlane.f32.xlu0 %v320
      %v370 = vpop.xlane.xlu0 %369
      %371 = vadd.xlane.f32.xlu0 %v323
      %v372 = vpop.xlane.xlu0 %371
      %373 = vadd.xlane.f32.xlu0 %v325
      %v374 = vpop.xlane.xlu0 %373
      %v375 = vadd.f32 %v327, %v344
      %v376 = vadd.f32 %v328, %v346
      %v377 = vadd.f32 %v329, %v348
      %v378 = vadd.f32 %v330, %v350
      %v379 = vadd.f32 %v331, %v352
      %v380 = vadd.f32 %v332, %v354
      %v381 = vadd.f32 %v333, %v356
      %v382 = vadd.f32 %v334, %v358
      %v383 = vadd.f32 %v335, %v360
      %v384 = vadd.f32 %v336, %v362
      %v385 = vadd.f32 %v337, %v364
      %v386 = vadd.f32 %v338, %v366
      %v387 = vadd.f32 %v339, %v368
      %v388 = vadd.f32 %v340, %v370
      %v389 = vadd.f32 %v341, %v372
      %v390 = vadd.f32 %v342, %v374
      %vm391 = vcmask 7168
      %392 = vst.msk [vmem:[#allocation3] sm:$0xff] %vm391, %v375
      %393 = vst.msk [vmem:[#allocation3 + $0x8] sm:$0xff] %vm391, %v376
      %394 = vst.msk [vmem:[#allocation3 + $0x10] sm:$0xff] %vm391, %v377
      %395 = vst.msk [vmem:[#allocation3 + $0x18] sm:$0xff] %vm391, %v378
      %396 = vst.msk [vmem:[#allocation3 + $0x20] sm:$0xff] %vm391, %v379
      %397 = vst.msk [vmem:[#allocation3 + $0x28] sm:$0xff] %vm391, %v380
      %398 = vst.msk [vmem:[#allocation3 + $0x30] sm:$0xff] %vm391, %v381
      %399 = vst.msk [vmem:[#allocation3 + $0x38] sm:$0xff] %vm391, %v382
      %400 = vst.msk [vmem:[#allocation3 + $0x40] sm:$0xff] %vm391, %v383
      %401 = vst.msk [vmem:[#allocation3 + $0x48] sm:$0xff] %vm391, %v384
      %402 = vst.msk [vmem:[#allocation3 + $0x50] sm:$0xff] %vm391, %v385
      %403 = vst.msk [vmem:[#allocation3 + $0x58] sm:$0xff] %vm391, %v386
      %404 = vst.msk [vmem:[#allocation3 + $0x60] sm:$0xff] %vm391, %v387
      %405 = vst.msk [vmem:[#allocation3 + $0x68] sm:$0xff] %vm391, %v388
      %406 = vst.msk [vmem:[#allocation3 + $0x70] sm:$0xff] %vm391, %v389
      %407 = vst.msk [vmem:[#allocation3 + $0x78] sm:$0xff] %vm391, %v390
      %v408 = vld [vmem:[%s3] sm:$0x1]
      %v410 = vperm.slane %v408, 0
      %v412 = vmul.f32 %v288, %v410
      %v413 = vmul.f32 %v290, %v410
      %v414 = vmul.f32 %v293, %v410
      %v415 = vmul.f32 %v295, %v410
      %v416 = vmul.f32 %v298, %v410
      %v417 = vmul.f32 %v300, %v410
      %v418 = vmul.f32 %v303, %v410
      %v419 = vmul.f32 %v305, %v410
      %v420 = vmul.f32 %v308, %v410
      %v421 = vmul.f32 %v310, %v410
      %v422 = vmul.f32 %v313, %v410
      %v423 = vmul.f32 %v315, %v410
      %v424 = vmul.f32 %v318, %v410
      %v425 = vmul.f32 %v320, %v410
      %v426 = vmul.f32 %v323, %v410
      %v427 = vmul.f32 %v325, %v410
      %v428 = vld [vmem:[#allocation2] sm:$0xff]
      %v429 = vld [vmem:[#allocation2 + $0x8] sm:$0xff]
      %v430 = vld [vmem:[#allocation2 + $0x10] sm:$0xff]
      %v431 = vld [vmem:[#allocation2 + $0x18] sm:$0xff]
      %v432 = vld [vmem:[#allocation2 + $0x20] sm:$0xff]
      %v433 = vld [vmem:[#allocation2 + $0x28] sm:$0xff]
      %v434 = vld [vmem:[#allocation2 + $0x30] sm:$0xff]
      %v435 = vld [vmem:[#allocation2 + $0x38] sm:$0xff]
      %v436 = vld [vmem:[#allocation2 + $0x40] sm:$0xff]
      %v437 = vld [vmem:[#allocation2 + $0x48] sm:$0xff]
      %v438 = vld [vmem:[#allocation2 + $0x50] sm:$0xff]
      %v439 = vld [vmem:[#allocation2 + $0x58] sm:$0xff]
      %v440 = vld [vmem:[#allocation2 + $0x60] sm:$0xff]
      %v441 = vld [vmem:[#allocation2 + $0x68] sm:$0xff]
      %v442 = vld [vmem:[#allocation2 + $0x70] sm:$0xff]
      %v443 = vld [vmem:[#allocation2 + $0x78] sm:$0xff]
      %v444 = vld [vmem:[%s4] sm:$0xff]
      %v445 = vld [vmem:[%s4 + $0x8] sm:$0xff]
      %v446 = vld [vmem:[%s4 + $0x10] sm:$0xff]
      %v447 = vld [vmem:[%s4 + $0x18] sm:$0xff]
      %v448 = vld [vmem:[%s4 + $0x20] sm:$0xff]
      %v449 = vld [vmem:[%s4 + $0x28] sm:$0xff]
      %v450 = vld [vmem:[%s4 + $0x30] sm:$0xff]
      %v451 = vld [vmem:[%s4 + $0x38] sm:$0xff]
      %v452 = vld [vmem:[%s4 + $0x40] sm:$0xff]
      %v453 = vld [vmem:[%s4 + $0x48] sm:$0xff]
      %v454 = vld [vmem:[%s4 + $0x50] sm:$0xff]
      %v455 = vld [vmem:[%s4 + $0x58] sm:$0xff]
      %v456 = vld [vmem:[%s4 + $0x60] sm:$0xff]
      %v457 = vld [vmem:[%s4 + $0x68] sm:$0xff]
      %v458 = vld [vmem:[%s4 + $0x70] sm:$0xff]
      %v459 = vld [vmem:[%s4 + $0x78] sm:$0xff]
      %460 = vmatpush.msra.mxu0 %v459
      %461 = vmatpush.msra.mxu0 %v458
      %462 = vmatpush.msra.mxu0 %v457
      %463 = vmatpush.msra.mxu0 %v456
      %464 = vmatpush.msra.mxu0 %v455
      %465 = vmatpush.msra.mxu0 %v454
      %466 = vmatpush.msra.mxu0 %v453
      %467 = vmatpush.msra.mxu0 %v452
      %468 = vmatpush.msra.mxu0 %v451
      %469 = vmatpush.msra.mxu0 %v450
      %470 = vmatpush.msra.mxu0 %v449
      %471 = vmatpush.msra.mxu0 %v448
      %472 = vmatpush.msra.mxu0 %v447
      %473 = vmatpush.msra.mxu0 %v446
      %474 = vmatpush.msra.mxu0 %v445
      %475 = vmatpush.msra.mxu0 %v444
      %476 = vmatmul.f32.gmra.mxu0 %v412
      %v477 = vpop.f32.mrf.mxu0
      %v478 = vadd.f32 0.0, %v477
      %479 = vmatmul.f32.gmra.mxu0 %v413
      %v480 = vpop.f32.mrf.mxu0
      %v481 = vadd.f32 0.0, %v480
      %482 = vmatmul.f32.gmra.mxu0 %v414
      %v483 = vpop.f32.mrf.mxu0
      %v484 = vadd.f32 0.0, %v483
      %485 = vmatmul.f32.gmra.mxu0 %v415
      %v486 = vpop.f32.mrf.mxu0
      %v487 = vadd.f32 0.0, %v486
      %488 = vmatmul.f32.gmra.mxu0 %v416
      %v489 = vpop.f32.mrf.mxu0
      %v490 = vadd.f32 0.0, %v489
      %491 = vmatmul.f32.gmra.mxu0 %v417
      %v492 = vpop.f32.mrf.mxu0
      %v493 = vadd.f32 0.0, %v492
      %494 = vmatmul.f32.gmra.mxu0 %v418
      %v495 = vpop.f32.mrf.mxu0
      %v496 = vadd.f32 0.0, %v495
      %497 = vmatmul.f32.gmra.mxu0 %v419
      %v498 = vpop.f32.mrf.mxu0
      %v499 = vadd.f32 0.0, %v498
      %500 = vmatmul.f32.gmra.mxu0 %v420
      %v501 = vpop.f32.mrf.mxu0
      %v502 = vadd.f32 0.0, %v501
      %503 = vmatmul.f32.gmra.mxu0 %v421
      %v504 = vpop.f32.mrf.mxu0
      %v505 = vadd.f32 0.0, %v504
      %506 = vmatmul.f32.gmra.mxu0 %v422
      %v507 = vpop.f32.mrf.mxu0
      %v508 = vadd.f32 0.0, %v507
      %509 = vmatmul.f32.gmra.mxu0 %v423
      %v510 = vpop.f32.mrf.mxu0
      %v511 = vadd.f32 0.0, %v510
      %512 = vmatmul.f32.gmra.mxu0 %v424
      %v513 = vpop.f32.mrf.mxu0
      %v514 = vadd.f32 0.0, %v513
      %515 = vmatmul.f32.gmra.mxu0 %v425
      %v516 = vpop.f32.mrf.mxu0
      %v517 = vadd.f32 0.0, %v516
      %518 = vmatmul.f32.gmra.mxu0 %v426
      %v519 = vpop.f32.mrf.mxu0
      %v520 = vadd.f32 0.0, %v519
      %521 = vmatmul.f32.gmra.mxu0 %v427
      %v522 = vpop.f32.mrf.mxu0
      %v523 = vadd.f32 0.0, %v522
      %524 = vdwg.mxu0
      %v525 = vadd.f32 %v428, %v478
      %v526 = vadd.f32 %v429, %v481
      %v527 = vadd.f32 %v430, %v484
      %v528 = vadd.f32 %v431, %v487
      %v529 = vadd.f32 %v432, %v490
      %v530 = vadd.f32 %v433, %v493
      %v531 = vadd.f32 %v434, %v496
      %v532 = vadd.f32 %v435, %v499
      %v533 = vadd.f32 %v436, %v502
      %v534 = vadd.f32 %v437, %v505
      %v535 = vadd.f32 %v438, %v508
      %v536 = vadd.f32 %v439, %v511
      %v537 = vadd.f32 %v440, %v514
      %v538 = vadd.f32 %v441, %v517
      %v539 = vadd.f32 %v442, %v520
      %v540 = vadd.f32 %v443, %v523
      %541 = vst [vmem:[#allocation2] sm:$0xff] %v525
      %542 = vst [vmem:[#allocation2 + $0x8] sm:$0xff] %v526
      %543 = vst [vmem:[#allocation2 + $0x10] sm:$0xff] %v527
      %544 = vst [vmem:[#allocation2 + $0x18] sm:$0xff] %v528
      %545 = vst [vmem:[#allocation2 + $0x20] sm:$0xff] %v529
      %546 = vst [vmem:[#allocation2 + $0x28] sm:$0xff] %v530
      %547 = vst [vmem:[#allocation2 + $0x30] sm:$0xff] %v531
      %548 = vst [vmem:[#allocation2 + $0x38] sm:$0xff] %v532
      %549 = vst [vmem:[#allocation2 + $0x40] sm:$0xff] %v533
      %550 = vst [vmem:[#allocation2 + $0x48] sm:$0xff] %v534
      %551 = vst [vmem:[#allocation2 + $0x50] sm:$0xff] %v535
      %552 = vst [vmem:[#allocation2 + $0x58] sm:$0xff] %v536
      %553 = vst [vmem:[#allocation2 + $0x60] sm:$0xff] %v537
      %554 = vst [vmem:[#allocation2 + $0x68] sm:$0xff] %v538
      %555 = vst [vmem:[#allocation2 + $0x70] sm:$0xff] %v539
      %556 = vst [vmem:[#allocation2 + $0x78] sm:$0xff] %v540
    $region25: #{tpu_custom_call.1} parent=1 // pred_fallthru
      _
    // Predicated region
    $region26: #{tpu_custom_call.1} parent=1 // pred_check
      _
    $region27: #{tpu_custom_call.1} parent=1 // pred_check_branch
      %558 = sbr.rel (%p23) target = $region29
    $region28: #{tpu_custom_call.1} parent=1 // pred_region
      %v559 = vld [vmem:[#allocation3] sm:$0xff]
      %v560 = vld [vmem:[#allocation3 + $0x8] sm:$0xff]
      %v561 = vld [vmem:[#allocation3 + $0x10] sm:$0xff]
      %v562 = vld [vmem:[#allocation3 + $0x18] sm:$0xff]
      %v563 = vld [vmem:[#allocation3 + $0x20] sm:$0xff]
      %v564 = vld [vmem:[#allocation3 + $0x28] sm:$0xff]
      %v565 = vld [vmem:[#allocation3 + $0x30] sm:$0xff]
      %v566 = vld [vmem:[#allocation3 + $0x38] sm:$0xff]
      %v567 = vld [vmem:[#allocation3 + $0x40] sm:$0xff]
      %v568 = vld [vmem:[#allocation3 + $0x48] sm:$0xff]
      %v569 = vld [vmem:[#allocation3 + $0x50] sm:$0xff]
      %v570 = vld [vmem:[#allocation3 + $0x58] sm:$0xff]
      %v571 = vld [vmem:[#allocation3 + $0x60] sm:$0xff]
      %v572 = vld [vmem:[#allocation3 + $0x68] sm:$0xff]
      %v573 = vld [vmem:[#allocation3 + $0x70] sm:$0xff]
      %v574 = vld [vmem:[#allocation3 + $0x78] sm:$0xff]
      %vm575 = vcmp.gt.f32.partialorder %v559, 0.0
      %vm576 = vcmp.gt.f32.partialorder %v560, 0.0
      %vm577 = vcmp.gt.f32.partialorder %v561, 0.0
      %vm578 = vcmp.gt.f32.partialorder %v562, 0.0
      %vm579 = vcmp.gt.f32.partialorder %v563, 0.0
      %vm580 = vcmp.gt.f32.partialorder %v564, 0.0
      %vm581 = vcmp.gt.f32.partialorder %v565, 0.0
      %vm582 = vcmp.gt.f32.partialorder %v566, 0.0
      %vm583 = vcmp.gt.f32.partialorder %v567, 0.0
      %vm584 = vcmp.gt.f32.partialorder %v568, 0.0
      %vm585 = vcmp.gt.f32.partialorder %v569, 0.0
      %vm586 = vcmp.gt.f32.partialorder %v570, 0.0
      %vm587 = vcmp.gt.f32.partialorder %v571, 0.0
      %vm588 = vcmp.gt.f32.partialorder %v572, 0.0
      %vm589 = vcmp.gt.f32.partialorder %v573, 0.0
      %vm590 = vcmp.gt.f32.partialorder %v574, 0.0
      %v591 = vsel %vm575, %v559, 1.0
      %v592 = vsel %vm576, %v560, 1.0
      %v593 = vsel %vm577, %v561, 1.0
      %v594 = vsel %vm578, %v562, 1.0
      %v595 = vsel %vm579, %v563, 1.0
      %v596 = vsel %vm580, %v564, 1.0
      %v597 = vsel %vm581, %v565, 1.0
      %v598 = vsel %vm582, %v566, 1.0
      %v599 = vsel %vm583, %v567, 1.0
      %v600 = vsel %vm584, %v568, 1.0
      %v601 = vsel %vm585, %v569, 1.0
      %v602 = vsel %vm586, %v570, 1.0
      %v603 = vsel %vm587, %v571, 1.0
      %v604 = vsel %vm588, %v572, 1.0
      %v605 = vsel %vm589, %v573, 1.0
      %v606 = vsel %vm590, %v574, 1.0
      %v607 = vld [vmem:[#allocation2] sm:$0xff]
      %v608 = vld [vmem:[#allocation2 + $0x8] sm:$0xff]
      %v609 = vld [vmem:[#allocation2 + $0x10] sm:$0xff]
      %v610 = vld [vmem:[#allocation2 + $0x18] sm:$0xff]
      %v611 = vld [vmem:[#allocation2 + $0x20] sm:$0xff]
      %v612 = vld [vmem:[#allocation2 + $0x28] sm:$0xff]
      %v613 = vld [vmem:[#allocation2 + $0x30] sm:$0xff]
      %v614 = vld [vmem:[#allocation2 + $0x38] sm:$0xff]
      %v615 = vld [vmem:[#allocation2 + $0x40] sm:$0xff]
      %v616 = vld [vmem:[#allocation2 + $0x48] sm:$0xff]
      %v617 = vld [vmem:[#allocation2 + $0x50] sm:$0xff]
      %v618 = vld [vmem:[#allocation2 + $0x58] sm:$0xff]
      %v619 = vld [vmem:[#allocation2 + $0x60] sm:$0xff]
      %v620 = vld [vmem:[#allocation2 + $0x68] sm:$0xff]
      %v621 = vld [vmem:[#allocation2 + $0x70] sm:$0xff]
      %v622 = vld [vmem:[#allocation2 + $0x78] sm:$0xff]
      %v623 = vrcp.pop %v591
      %v624 = vmul.f32 %v591, %v623
      %v625 = vsub.f32 1.0, %v624
      %v626 = vmul.f32 %v623, %v625
      %v627 = vadd.f32 %v623, %v626
      %vm628 = vweird.f32 %v591
      %vm629 = vweird.f32 %v623
      %vm630 = vmor %vm628, %vm629
      %v631 = vsel %vm630, %v623, %v627
      %v632 = vand.u32 2147483647, %v591
      %vm633 = vcmp.eq.f32.partialorder %v632, 8.507059e+37
      %v634 = vand.u32 %v591, 2147483648
      %v635 = vor.u32 1.1754944e-38, %v634
      %v636 = vsel %vm633, %v635, %v631
      %v637 = vmul.f32 11.313708, %v636
      %v638 = vrcp.pop %v592
      %v639 = vmul.f32 %v592, %v638
      %v640 = vsub.f32 1.0, %v639
      %v641 = vmul.f32 %v638, %v640
      %v642 = vadd.f32 %v638, %v641
      %vm643 = vweird.f32 %v592
      %vm644 = vweird.f32 %v638
      %vm645 = vmor %vm643, %vm644
      %v646 = vsel %vm645, %v638, %v642
      %v647 = vand.u32 2147483647, %v592
      %vm648 = vcmp.eq.f32.partialorder %v647, 8.507059e+37
      %v649 = vand.u32 %v592, 2147483648
      %v650 = vor.u32 1.1754944e-38, %v649
      %v651 = vsel %vm648, %v650, %v646
      %v652 = vmul.f32 11.313708, %v651
      %v653 = vrcp.pop %v593
      %v654 = vmul.f32 %v593, %v653
      %v655 = vsub.f32 1.0, %v654
      %v656 = vmul.f32 %v653, %v655
      %v657 = vadd.f32 %v653, %v656
      %vm658 = vweird.f32 %v593
      %vm659 = vweird.f32 %v653
      %vm660 = vmor %vm658, %vm659
      %v661 = vsel %vm660, %v653, %v657
      %v662 = vand.u32 2147483647, %v593
      %vm663 = vcmp.eq.f32.partialorder %v662, 8.507059e+37
      %v664 = vand.u32 %v593, 2147483648
      %v665 = vor.u32 1.1754944e-38, %v664
      %v666 = vsel %vm663, %v665, %v661
      %v667 = vmul.f32 11.313708, %v666
      %v668 = vrcp.pop %v594
      %v669 = vmul.f32 %v594, %v668
      %v670 = vsub.f32 1.0, %v669
      %v671 = vmul.f32 %v668, %v670
      %v672 = vadd.f32 %v668, %v671
      %vm673 = vweird.f32 %v594
      %vm674 = vweird.f32 %v668
      %vm675 = vmor %vm673, %vm674
      %v676 = vsel %vm675, %v668, %v672
      %v677 = vand.u32 2147483647, %v594
      %vm678 = vcmp.eq.f32.partialorder %v677, 8.507059e+37
      %v679 = vand.u32 %v594, 2147483648
      %v680 = vor.u32 1.1754944e-38, %v679
      %v681 = vsel %vm678, %v680, %v676
      %v682 = vmul.f32 11.313708, %v681
      %v683 = vrcp.pop %v595
      %v684 = vmul.f32 %v595, %v683
      %v685 = vsub.f32 1.0, %v684
      %v686 = vmul.f32 %v683, %v685
      %v687 = vadd.f32 %v683, %v686
      %vm688 = vweird.f32 %v595
      %vm689 = vweird.f32 %v683
      %vm690 = vmor %vm688, %vm689
      %v691 = vsel %vm690, %v683, %v687
      %v692 = vand.u32 2147483647, %v595
      %vm693 = vcmp.eq.f32.partialorder %v692, 8.507059e+37
      %v694 = vand.u32 %v595, 2147483648
      %v695 = vor.u32 1.1754944e-38, %v694
      %v696 = vsel %vm693, %v695, %v691
      %v697 = vmul.f32 11.313708, %v696
      %v698 = vrcp.pop %v596
      %v699 = vmul.f32 %v596, %v698
      %v700 = vsub.f32 1.0, %v699
      %v701 = vmul.f32 %v698, %v700
      %v702 = vadd.f32 %v698, %v701
      %vm703 = vweird.f32 %v596
      %vm704 = vweird.f32 %v698
      %vm705 = vmor %vm703, %vm704
      %v706 = vsel %vm705, %v698, %v702
      %v707 = vand.u32 2147483647, %v596
      %vm708 = vcmp.eq.f32.partialorder %v707, 8.507059e+37
      %v709 = vand.u32 %v596, 2147483648
      %v710 = vor.u32 1.1754944e-38, %v709
      %v711 = vsel %vm708, %v710, %v706
      %v712 = vmul.f32 11.313708, %v711
      %v713 = vrcp.pop %v597
      %v714 = vmul.f32 %v597, %v713
      %v715 = vsub.f32 1.0, %v714
      %v716 = vmul.f32 %v713, %v715
      %v717 = vadd.f32 %v713, %v716
      %vm718 = vweird.f32 %v597
      %vm719 = vweird.f32 %v713
      %vm720 = vmor %vm718, %vm719
      %v721 = vsel %vm720, %v713, %v717
      %v722 = vand.u32 2147483647, %v597
      %vm723 = vcmp.eq.f32.partialorder %v722, 8.507059e+37
      %v724 = vand.u32 %v597, 2147483648
      %v725 = vor.u32 1.1754944e-38, %v724
      %v726 = vsel %vm723, %v725, %v721
      %v727 = vmul.f32 11.313708, %v726
      %v728 = vrcp.pop %v598
      %v729 = vmul.f32 %v598, %v728
      %v730 = vsub.f32 1.0, %v729
      %v731 = vmul.f32 %v728, %v730
      %v732 = vadd.f32 %v728, %v731
      %vm733 = vweird.f32 %v598
      %vm734 = vweird.f32 %v728
      %vm735 = vmor %vm733, %vm734
      %v736 = vsel %vm735, %v728, %v732
      %v737 = vand.u32 2147483647, %v598
      %vm738 = vcmp.eq.f32.partialorder %v737, 8.507059e+37
      %v739 = vand.u32 %v598, 2147483648
      %v740 = vor.u32 1.1754944e-38, %v739
      %v741 = vsel %vm738, %v740, %v736
      %v742 = vmul.f32 11.313708, %v741
      %v743 = vrcp.pop %v599
      %v744 = vmul.f32 %v599, %v743
      %v745 = vsub.f32 1.0, %v744
      %v746 = vmul.f32 %v743, %v745
      %v747 = vadd.f32 %v743, %v746
      %vm748 = vweird.f32 %v599
      %vm749 = vweird.f32 %v743
      %vm750 = vmor %vm748, %vm749
      %v751 = vsel %vm750, %v743, %v747
      %v752 = vand.u32 2147483647, %v599
      %vm753 = vcmp.eq.f32.partialorder %v752, 8.507059e+37
      %v754 = vand.u32 %v599, 2147483648
      %v755 = vor.u32 1.1754944e-38, %v754
      %v756 = vsel %vm753, %v755, %v751
      %v757 = vmul.f32 11.313708, %v756
      %v758 = vrcp.pop %v600
      %v759 = vmul.f32 %v600, %v758
      %v760 = vsub.f32 1.0, %v759
      %v761 = vmul.f32 %v758, %v760
      %v762 = vadd.f32 %v758, %v761
      %vm763 = vweird.f32 %v600
      %vm764 = vweird.f32 %v758
      %vm765 = vmor %vm763, %vm764
      %v766 = vsel %vm765, %v758, %v762
      %v767 = vand.u32 2147483647, %v600
      %vm768 = vcmp.eq.f32.partialorder %v767, 8.507059e+37
      %v769 = vand.u32 %v600, 2147483648
      %v770 = vor.u32 1.1754944e-38, %v769
      %v771 = vsel %vm768, %v770, %v766
      %v772 = vmul.f32 11.313708, %v771
      %v773 = vrcp.pop %v601
      %v774 = vmul.f32 %v601, %v773
      %v775 = vsub.f32 1.0, %v774
      %v776 = vmul.f32 %v773, %v775
      %v777 = vadd.f32 %v773, %v776
      %vm778 = vweird.f32 %v601
      %vm779 = vweird.f32 %v773
      %vm780 = vmor %vm778, %vm779
      %v781 = vsel %vm780, %v773, %v777
      %v782 = vand.u32 2147483647, %v601
      %vm783 = vcmp.eq.f32.partialorder %v782, 8.507059e+37
      %v784 = vand.u32 %v601, 2147483648
      %v785 = vor.u32 1.1754944e-38, %v784
      %v786 = vsel %vm783, %v785, %v781
      %v787 = vmul.f32 11.313708, %v786
      %v788 = vrcp.pop %v602
      %v789 = vmul.f32 %v602, %v788
      %v790 = vsub.f32 1.0, %v789
      %v791 = vmul.f32 %v788, %v790
      %v792 = vadd.f32 %v788, %v791
      %vm793 = vweird.f32 %v602
      %vm794 = vweird.f32 %v788
      %vm795 = vmor %vm793, %vm794
      %v796 = vsel %vm795, %v788, %v792
      %v797 = vand.u32 2147483647, %v602
      %vm798 = vcmp.eq.f32.partialorder %v797, 8.507059e+37
      %v799 = vand.u32 %v602, 2147483648
      %v800 = vor.u32 1.1754944e-38, %v799
      %v801 = vsel %vm798, %v800, %v796
      %v802 = vmul.f32 11.313708, %v801
      %v803 = vrcp.pop %v603
      %v804 = vmul.f32 %v603, %v803
      %v805 = vsub.f32 1.0, %v804
      %v806 = vmul.f32 %v803, %v805
      %v807 = vadd.f32 %v803, %v806
      %vm808 = vweird.f32 %v603
      %vm809 = vweird.f32 %v803
      %vm810 = vmor %vm808, %vm809
      %v811 = vsel %vm810, %v803, %v807
      %v812 = vand.u32 2147483647, %v603
      %vm813 = vcmp.eq.f32.partialorder %v812, 8.507059e+37
      %v814 = vand.u32 %v603, 2147483648
      %v815 = vor.u32 1.1754944e-38, %v814
      %v816 = vsel %vm813, %v815, %v811
      %v817 = vmul.f32 11.313708, %v816
      %v818 = vrcp.pop %v604
      %v819 = vmul.f32 %v604, %v818
      %v820 = vsub.f32 1.0, %v819
      %v821 = vmul.f32 %v818, %v820
      %v822 = vadd.f32 %v818, %v821
      %vm823 = vweird.f32 %v604
      %vm824 = vweird.f32 %v818
      %vm825 = vmor %vm823, %vm824
      %v826 = vsel %vm825, %v818, %v822
      %v827 = vand.u32 2147483647, %v604
      %vm828 = vcmp.eq.f32.partialorder %v827, 8.507059e+37
      %v829 = vand.u32 %v604, 2147483648
      %v830 = vor.u32 1.1754944e-38, %v829
      %v831 = vsel %vm828, %v830, %v826
      %v832 = vmul.f32 11.313708, %v831
      %v833 = vrcp.pop %v605
      %v834 = vmul.f32 %v605, %v833
      %v835 = vsub.f32 1.0, %v834
      %v836 = vmul.f32 %v833, %v835
      %v837 = vadd.f32 %v833, %v836
      %vm838 = vweird.f32 %v605
      %vm839 = vweird.f32 %v833
      %vm840 = vmor %vm838, %vm839
      %v841 = vsel %vm840, %v833, %v837
      %v842 = vand.u32 2147483647, %v605
      %vm843 = vcmp.eq.f32.partialorder %v842, 8.507059e+37
      %v844 = vand.u32 %v605, 2147483648
      %v845 = vor.u32 1.1754944e-38, %v844
      %v846 = vsel %vm843, %v845, %v841
      %v847 = vmul.f32 11.313708, %v846
      %v848 = vrcp.pop %v606
      %v849 = vmul.f32 %v606, %v848
      %v850 = vsub.f32 1.0, %v849
      %v851 = vmul.f32 %v848, %v850
      %v852 = vadd.f32 %v848, %v851
      %vm853 = vweird.f32 %v606
      %vm854 = vweird.f32 %v848
      %vm855 = vmor %vm853, %vm854
      %v856 = vsel %vm855, %v848, %v852
      %v857 = vand.u32 2147483647, %v606
      %vm858 = vcmp.eq.f32.partialorder %v857, 8.507059e+37
      %v859 = vand.u32 %v606, 2147483648
      %v860 = vor.u32 1.1754944e-38, %v859
      %v861 = vsel %vm858, %v860, %v856
      %v862 = vmul.f32 11.313708, %v861
      %864 = vset.pattern.permute.xlu0 0
      %865 = vperm.xlu0 %864, %v637
      %v866 = vpop.permute.xlu0 %865
      %869 = vset.pattern.permute.xlu0 0
      %870 = vperm.xlu0 %869, %v652
      %v871 = vpop.permute.xlu0 %870
      %874 = vset.pattern.permute.xlu0 0
      %875 = vperm.xlu0 %874, %v667
      %v876 = vpop.permute.xlu0 %875
      %879 = vset.pattern.permute.xlu0 0
      %880 = vperm.xlu0 %879, %v682
      %v881 = vpop.permute.xlu0 %880
      %884 = vset.pattern.permute.xlu0 0
      %885 = vperm.xlu0 %884, %v697
      %v886 = vpop.permute.xlu0 %885
      %889 = vset.pattern.permute.xlu0 0
      %890 = vperm.xlu0 %889, %v712
      %v891 = vpop.permute.xlu0 %890
      %894 = vset.pattern.permute.xlu0 0
      %895 = vperm.xlu0 %894, %v727
      %v896 = vpop.permute.xlu0 %895
      %899 = vset.pattern.permute.xlu0 0
      %900 = vperm.xlu0 %899, %v742
      %v901 = vpop.permute.xlu0 %900
      %904 = vset.pattern.permute.xlu0 0
      %905 = vperm.xlu0 %904, %v757
      %v906 = vpop.permute.xlu0 %905
      %909 = vset.pattern.permute.xlu0 0
      %910 = vperm.xlu0 %909, %v772
      %v911 = vpop.permute.xlu0 %910
      %914 = vset.pattern.permute.xlu0 0
      %915 = vperm.xlu0 %914, %v787
      %v916 = vpop.permute.xlu0 %915
      %919 = vset.pattern.permute.xlu0 0
      %920 = vperm.xlu0 %919, %v802
      %v921 = vpop.permute.xlu0 %920
      %924 = vset.pattern.permute.xlu0 0
      %925 = vperm.xlu0 %924, %v817
      %v926 = vpop.permute.xlu0 %925
      %929 = vset.pattern.permute.xlu0 0
      %930 = vperm.xlu0 %929, %v832
      %v931 = vpop.permute.xlu0 %930
      %934 = vset.pattern.permute.xlu0 0
      %935 = vperm.xlu0 %934, %v847
      %v936 = vpop.permute.xlu0 %935
      %939 = vset.pattern.permute.xlu0 0
      %940 = vperm.xlu0 %939, %v862
      %v941 = vpop.permute.xlu0 %940
      %v943 = vmul.f32 %v607, %v866
      %v944 = vmul.f32 %v608, %v871
      %v945 = vmul.f32 %v609, %v876
      %v946 = vmul.f32 %v610, %v881
      %v947 = vmul.f32 %v611, %v886
      %v948 = vmul.f32 %v612, %v891
      %v949 = vmul.f32 %v613, %v896
      %v950 = vmul.f32 %v614, %v901
      %v951 = vmul.f32 %v615, %v906
      %v952 = vmul.f32 %v616, %v911
      %v953 = vmul.f32 %v617, %v916
      %v954 = vmul.f32 %v618, %v921
      %v955 = vmul.f32 %v619, %v926
      %v956 = vmul.f32 %v620, %v931
      %v957 = vmul.f32 %v621, %v936
      %v958 = vmul.f32 %v622, %v941
      %959 = vst [vmem:[#allocation6] sm:$0xff] %v943
      %960 = vst [vmem:[#allocation6 + $0x8] sm:$0xff] %v944
      %961 = vst [vmem:[#allocation6 + $0x10] sm:$0xff] %v945
      %962 = vst [vmem:[#allocation6 + $0x18] sm:$0xff] %v946
      %963 = vst [vmem:[#allocation6 + $0x20] sm:$0xff] %v947
      %964 = vst [vmem:[#allocation6 + $0x28] sm:$0xff] %v948
      %965 = vst [vmem:[#allocation6 + $0x30] sm:$0xff] %v949
      %966 = vst [vmem:[#allocation6 + $0x38] sm:$0xff] %v950
      %967 = vst [vmem:[#allocation6 + $0x40] sm:$0xff] %v951
      %968 = vst [vmem:[#allocation6 + $0x48] sm:$0xff] %v952
      %969 = vst [vmem:[#allocation6 + $0x50] sm:$0xff] %v953
      %970 = vst [vmem:[#allocation6 + $0x58] sm:$0xff] %v954
      %971 = vst [vmem:[#allocation6 + $0x60] sm:$0xff] %v955
      %972 = vst [vmem:[#allocation6 + $0x68] sm:$0xff] %v956
      %973 = vst [vmem:[#allocation6 + $0x70] sm:$0xff] %v957
      %974 = vst [vmem:[#allocation6 + $0x78] sm:$0xff] %v958
    $region29: #{tpu_custom_call.1} parent=1 // pred_fallthru
      _
    %p975 = scmp.le.s32.totalorder %s20, 0
    %p976 = pnand %p22, %p975
    %p977 = pneg %p976
    // Predicated region
    $region30: #{tpu_custom_call.1} parent=1 // pred_check
      _
    $region31: #{tpu_custom_call.1} parent=1 // pred_check_branch
      %979 = sbr.rel (%p976) target = $region33
    $region32: #{tpu_custom_call.1} parent=1 // pred_region
      %980 = vst [vmem:[#allocation6] sm:$0xff] 0.0
      %981 = vst [vmem:[#allocation6 + $0x8] sm:$0xff] 0.0
      %982 = vst [vmem:[#allocation6 + $0x10] sm:$0xff] 0.0
      %983 = vst [vmem:[#allocation6 + $0x18] sm:$0xff] 0.0
      %984 = vst [vmem:[#allocation6 + $0x20] sm:$0xff] 0.0
      %985 = vst [vmem:[#allocation6 + $0x28] sm:$0xff] 0.0
      %986 = vst [vmem:[#allocation6 + $0x30] sm:$0xff] 0.0
      %987 = vst [vmem:[#allocation6 + $0x38] sm:$0xff] 0.0
      %988 = vst [vmem:[#allocation6 + $0x40] sm:$0xff] 0.0
      %989 = vst [vmem:[#allocation6 + $0x48] sm:$0xff] 0.0
      %990 = vst [vmem:[#allocation6 + $0x50] sm:$0xff] 0.0
      %991 = vst [vmem:[#allocation6 + $0x58] sm:$0xff] 0.0
      %992 = vst [vmem:[#allocation6 + $0x60] sm:$0xff] 0.0
      %993 = vst [vmem:[#allocation6 + $0x68] sm:$0xff] 0.0
      %994 = vst [vmem:[#allocation6 + $0x70] sm:$0xff] 0.0
      %995 = vst [vmem:[#allocation6 + $0x78] sm:$0xff] 0.0
    $region33: #{tpu_custom_call.1} parent=1 // pred_fallthru
      _
    // Predicated region
    $region34: #{tpu_custom_call.1} parent=1 // pred_check
      _
    $region35: #{tpu_custom_call.1} parent=1 // pred_check_branch
      %997 = sbr.rel (0) target = $region37
    $region36: #{tpu_custom_call.1} parent=1 // pred_region
      %999 = vsyncadd [#allocation7], 0
      %s1000 = sshll.u32 [#allocation6], 4
      %s1001 = int_to_ptr.vmem [resolvable:$true] %s1000
      %s1002 = sshll.u32 %s5, 4
      %s1003 = int_to_ptr.hbm [resolvable:$true] %s1002
      %1008 = dma.vmem_to_hbm [thread:$0]  %s1001, 2048, %s1003, [#allocation7], 128, 128, 8
    $region37: #{tpu_custom_call.1} parent=1 // pred_fallthru
      _
    // Predicated region
    $region38: #{tpu_custom_call.1} parent=1 // pred_check
      _
    $region39: #{tpu_custom_call.1} parent=1 // pred_check_branch
      %1010 = sbr.rel (0) target = $region41
    $region40: #{tpu_custom_call.1} parent=1 // pred_region
      %1012 = dma.done [#allocation7], 2048
    $region41: #{tpu_custom_call.1} parent=1 // pred_fallthru
      _
    %1013 = vsyncpa [#allocation7], 1

</llo_original>
